<compile_context>
chip_gen: v6e
topology: v6e:2x2x1
jax: 0.10.0
libtpu: 0.0.40
codegen_flags: <defaults>
</compile_context>

<pallas_src>
import functools

import jax
import jax.numpy as jnp
from jax.experimental import pallas as pl
from jax.experimental.pallas import tpu as pltpu

LANE = 128
SUBLANE = 8


def _round_up(x, m):
    return (x + m - 1) // m * m


def _pick_tile_b(b_pad, max_tile_b=256):
    """Largest multiple-of-8 tile that divides b_pad (no redundant rows),
    capped so medium/large batches produce a grid of >= 2 steps."""
    cap = min(max_tile_b, b_pad)
    if b_pad >= 2 * SUBLANE:
        # Ensure >= 2 grid steps so the batch axis can shard across v7x's
        # two TensorCores (harmless ~0.35us/step overhead on v5e/v6e).
        cap = min(cap, _round_up(-(-b_pad // 2), SUBLANE))
    t = max(SUBLANE, (cap // SUBLANE) * SUBLANE)
    while t > SUBLANE and b_pad % t != 0:
        t -= SUBLANE
    return t


def _fused_mlp_kernel(*refs, n_layers: int):
    """Fused MLP: chain of (x @ W + b) with ReLU between layers.

    refs layout: (x_ref, w0, b0, w1, b1, ..., w_{L-1}, b_{L-1}, o_ref)
      x_ref: (TILE_B, n_input)        VMEM, f32
      w_l:   (F_l, F_{l+1}_pad)       VMEM, bf16 (resident across batch grid)
      b_l:   (1, F_{l+1}_pad)         VMEM, f32
      o_ref: (TILE_B, F_out_pad)      VMEM, f32
    """
    x_ref = refs[0]
    o_ref = refs[-1]
    wb_refs = refs[1:-1]

    h = x_ref[...]
    for layer in range(n_layers):
        w = wb_refs[2 * layer][...]        # bf16
        b = wb_refs[2 * layer + 1][...]    # f32
        # bf16 operands, f32 MXU accumulation.
        h = jnp.dot(h.astype(jnp.bfloat16), w,
                    preferred_element_type=jnp.float32) + b
        if layer != n_layers - 1:
            h = jnp.maximum(h, 0.0)
    o_ref[...] = h.astype(o_ref.dtype)


def fused_mlp_forward(x, padded_params, n_input, n_output, *, max_tile_b=256):
    """Run the whole MLP in one pallas_call. x: (B, n_input) float32."""
    B = x.shape[0]
    n_layers = len(padded_params)
    f_out_pad = padded_params[-1][0].shape[1]

    # Pad only the batch dim, and only to the next sublane multiple.
    b_pad = _round_up(B, SUBLANE)
    tile_b = _pick_tile_b(b_pad, max_tile_b)
    x_p = x if b_pad == B else jnp.pad(x, ((0, b_pad - B), (0, 0)))

    in_specs = [pl.BlockSpec((tile_b, n_input), lambda i: (i, 0))]
    inputs = [x_p]
    flops = 0
    wb_bytes = 0
    for w, b in padded_params:
        # Full-array weight/bias blocks, constant index_map -> DMA'd once,
        # resident in VMEM across all batch-grid iterations.
        in_specs.append(pl.BlockSpec(w.shape, lambda i: (0, 0)))
        in_specs.append(pl.BlockSpec(b.shape, lambda i: (0, 0)))
        inputs.append(w)
        inputs.append(b)
        flops += 2 * b_pad * w.shape[0] * w.shape[1]
        wb_bytes += w.size * w.dtype.itemsize + b.size * b.dtype.itemsize

    # Explicit VMEM budget: pipeline double-buffers every input/output block.
    need = 2 * (tile_b * n_input * 4 + tile_b * f_out_pad * 4) + 2 * wb_bytes
    vmem_limit = int(min(64 << 20, max(2 * need + (2 << 20), 32 << 20)))

    cost = pl.CostEstimate(
        flops=flops,
        transcendentals=0,
        bytes_accessed=x_p.size * 4 + b_pad * f_out_pad * 4 + wb_bytes,
    )

    out = pl.pallas_call(
        functools.partial(_fused_mlp_kernel, n_layers=n_layers),
        out_shape=jax.ShapeDtypeStruct((b_pad, f_out_pad), jnp.float32),
        grid=(b_pad // tile_b,),
        in_specs=in_specs,
        out_specs=pl.BlockSpec((tile_b, f_out_pad), lambda i: (i, 0)),
        compiler_params=pltpu.CompilerParams(
            dimension_semantics=("parallel",),
            vmem_limit_bytes=vmem_limit,
        ),
        cost_estimate=cost,
    )(*inputs)
    return out[:B, :n_output]


class Network:
    """JAX/Pallas port of the PyTorch Q-learning MLP.

    forward: ReLU after every layer except the last (plain Linear at the end).
    """

    def __init__(self, n_input, n_output, n_hidden, key):
        if isinstance(n_hidden, int):
            n_hidden = [n_hidden]
        self.n_input = n_input
        self.n_output = n_output
        dims = [n_input] + list(n_hidden) + [n_output]

        self.params = []         # unpadded f32 (fan_in, fan_out)/(fan_out,) — reference
        self.padded_params = []  # kernel: W bf16 lane-padded, b f32 (1, F_pad)
        for i in range(len(dims) - 1):
            fan_in, fan_out = dims[i], dims[i + 1]
            key, wk, bk = jax.random.split(key, 3)
            # PyTorch default Linear init: U(-1/sqrt(fan_in), 1/sqrt(fan_in))
            bound = 1.0 / jnp.sqrt(jnp.float32(fan_in))
            w = jax.random.uniform(
                wk, (fan_in, fan_out), jnp.float32, -bound, bound
            )
            b = jax.random.uniform(bk, (fan_out,), jnp.float32, -bound, bound)
            self.params.append((w, b))

            # First layer keeps its true fan_in (so x needs no feature pad);
            # later layers' fan_in matches the previous layer's padded fan_out.
            fi_pad = fan_in if i == 0 else _round_up(fan_in, LANE)
            fo_pad = _round_up(fan_out, LANE)
            w_pad = (
                jnp.zeros((fi_pad, fo_pad), jnp.float32)
                .at[:fan_in, :fan_out].set(w)
                .astype(jnp.bfloat16)
            )
            b_pad = jnp.zeros((1, fo_pad), jnp.float32).at[0, :fan_out].set(b)
            self.padded_params.append((w_pad, b_pad))

    def __call__(self, x):
        return fused_mlp_forward(
            x, self.padded_params, self.n_input, self.n_output
        )


def reference_forward(net, x):
    """Pure-JAX f32 reference for correctness checking (unpadded params)."""
    n_layers = len(net.params)
    for idx, (w, b) in enumerate(net.params):
        x = x @ w + b
        if idx != n_layers - 1:
            x = jnp.maximum(x, 0.0)
    return x


if __name__ == "__main__":
    key = jax.random.PRNGKey(0)
    key, xk, xk2, pk = jax.random.split(key, 4)

    # Small shapes consistent with the module:
    # n_input=16, hidden=[32, 32], n_output=8.
    batch, n_input, n_hidden, n_output = 4, 16, [32, 32], 8

    net = Network(n_input, n_output, n_hidden, pk)

    # Case 1: tiny batch (single 8-row tile).
    x = jax.random.normal(xk, (batch, n_input), jnp.float32)
    out = jax.block_until_ready(net(x))
    ref = reference_forward(net, x)
    assert out.shape == (batch, n_output)
    # bf16 matmul operands (f32 accumulation) -> loosened parity tolerance.
    assert jnp.allclose(out, ref, atol=2e-2, rtol=2e-2), "mismatch vs reference"

    # Case 2: non-multiple-of-tile batch (exercises multi-step grid + slicing).
    batch2 = 20
    x2 = jax.random.normal(xk2, (batch2, n_input), jnp.float32)
    out2 = jax.block_until_ready(net(x2))
    ref2 = reference_forward(net, x2)
    assert out2.shape == (batch2, n_output)
    assert jnp.allclose(out2, ref2, atol=2e-2, rtol=2e-2), "mismatch vs reference (ragged batch)"

    print("KERNEL_OK")
</pallas_src>

<mosaic_0001>
module attributes {stable_mosaic.version = 11 : i64} {
  func.func @_fused_mlp_kernel(%arg0: i32, %arg1: memref<8x16xf32, #tpu.memory_space<vmem>>, %arg2: memref<16x128xbf16, #tpu.memory_space<vmem>>, %arg3: memref<1x128xf32, #tpu.memory_space<vmem>>, %arg4: memref<128x128xbf16, #tpu.memory_space<vmem>>, %arg5: memref<1x128xf32, #tpu.memory_space<vmem>>, %arg6: memref<128x128xbf16, #tpu.memory_space<vmem>>, %arg7: memref<1x128xf32, #tpu.memory_space<vmem>>, %arg8: memref<8x128xf32, #tpu.memory_space<vmem>>) attributes {dimension_semantics = [#tpu.dimension_semantics<parallel>], iteration_bounds = array<i64: 1>, scalar_prefetch = 0 : i64, scratch_operands = 0 : i64, tpu.core_type = #tpu.core_type<tc>, window_params = [{transform_indices = @transform_0, window_bounds = array<i64: 8, 16>}, {pipeline_mode = #tpu.pipeline_mode<synchronous>, transform_indices = @transform_1, window_bounds = array<i64: 16, 128>}, {pipeline_mode = #tpu.pipeline_mode<synchronous>, transform_indices = @transform_2, window_bounds = array<i64: 1, 128>}, {pipeline_mode = #tpu.pipeline_mode<synchronous>, transform_indices = @transform_3, window_bounds = array<i64: 128, 128>}, {pipeline_mode = #tpu.pipeline_mode<synchronous>, transform_indices = @transform_4, window_bounds = array<i64: 1, 128>}, {pipeline_mode = #tpu.pipeline_mode<synchronous>, transform_indices = @transform_5, window_bounds = array<i64: 128, 128>}, {pipeline_mode = #tpu.pipeline_mode<synchronous>, transform_indices = @transform_6, window_bounds = array<i64: 1, 128>}, {transform_indices = @transform_7, window_bounds = array<i64: 8, 128>}]} {
    %c0 = arith.constant 0 : index
    %c0_0 = arith.constant 0 : index
    %0 = vector.load %arg1[%c0, %c0_0] : memref<8x16xf32, #tpu.memory_space<vmem>>, vector<8x16xf32>
    %c0_1 = arith.constant 0 : index
    %c0_2 = arith.constant 0 : index
    %1 = vector.load %arg2[%c0_1, %c0_2] : memref<16x128xbf16, #tpu.memory_space<vmem>>, vector<16x128xbf16>
    %c0_3 = arith.constant 0 : index
    %c0_4 = arith.constant 0 : index
    %2 = vector.load %arg3[%c0_3, %c0_4] : memref<1x128xf32, #tpu.memory_space<vmem>>, vector<1x128xf32>
    %3 = arith.truncf %0 : vector<8x16xf32> to vector<8x16xbf16>
    %cst = arith.constant dense<0.000000e+00> : vector<8x128xf32>
    %4 = tpu.matmul %3, %1, %cst {dimension_numbers = #tpu.dot_dimension_numbers<[1], [0], [0], [1], [0, 0, 1, 1], [], []>} : vector<8x16xbf16>, vector<16x128xbf16>, vector<8x128xf32> -> vector<8x128xf32>
    %5 = vector.broadcast %2 : vector<1x128xf32> to vector<8x128xf32>
    %6 = arith.addf %4, %5 : vector<8x128xf32>
    %cst_5 = arith.constant 0.000000e+00 : f32
    %7 = vector.broadcast %cst_5 : f32 to vector<8x128xf32>
    %8 = arith.maximumf %6, %7 : vector<8x128xf32>
    %c0_6 = arith.constant 0 : index
    %c0_7 = arith.constant 0 : index
    %9 = vector.load %arg4[%c0_6, %c0_7] : memref<128x128xbf16, #tpu.memory_space<vmem>>, vector<128x128xbf16>
    %c0_8 = arith.constant 0 : index
    %c0_9 = arith.constant 0 : index
    %10 = vector.load %arg5[%c0_8, %c0_9] : memref<1x128xf32, #tpu.memory_space<vmem>>, vector<1x128xf32>
    %11 = arith.truncf %8 : vector<8x128xf32> to vector<8x128xbf16>
    %cst_10 = arith.constant dense<0.000000e+00> : vector<8x128xf32>
    %12 = tpu.matmul %11, %9, %cst_10 {dimension_numbers = #tpu.dot_dimension_numbers<[1], [0], [0], [1], [0, 0, 1, 1], [], []>} : vector<8x128xbf16>, vector<128x128xbf16>, vector<8x128xf32> -> vector<8x128xf32>
    %13 = vector.broadcast %10 : vector<1x128xf32> to vector<8x128xf32>
    %14 = arith.addf %12, %13 : vector<8x128xf32>
    %cst_11 = arith.constant 0.000000e+00 : f32
    %15 = vector.broadcast %cst_11 : f32 to vector<8x128xf32>
    %16 = arith.maximumf %14, %15 : vector<8x128xf32>
    %c0_12 = arith.constant 0 : index
    %c0_13 = arith.constant 0 : index
    %17 = vector.load %arg6[%c0_12, %c0_13] : memref<128x128xbf16, #tpu.memory_space<vmem>>, vector<128x128xbf16>
    %c0_14 = arith.constant 0 : index
    %c0_15 = arith.constant 0 : index
    %18 = vector.load %arg7[%c0_14, %c0_15] : memref<1x128xf32, #tpu.memory_space<vmem>>, vector<1x128xf32>
    %19 = arith.truncf %16 : vector<8x128xf32> to vector<8x128xbf16>
    %cst_16 = arith.constant dense<0.000000e+00> : vector<8x128xf32>
    %20 = tpu.matmul %19, %17, %cst_16 {dimension_numbers = #tpu.dot_dimension_numbers<[1], [0], [0], [1], [0, 0, 1, 1], [], []>} : vector<8x128xbf16>, vector<128x128xbf16>, vector<8x128xf32> -> vector<8x128xf32>
    %21 = vector.broadcast %18 : vector<1x128xf32> to vector<8x128xf32>
    %22 = arith.addf %20, %21 : vector<8x128xf32>
    %c0_17 = arith.constant 0 : index
    %c0_18 = arith.constant 0 : index
    %23 = vector.load %arg8[%c0_17, %c0_18] : memref<8x128xf32, #tpu.memory_space<vmem>>, vector<8x128xf32>
    tpu.vector_store %arg8[%c0_17, %c0_18], %22 {strides = array<i32>} : memref<8x128xf32, #tpu.memory_space<vmem>>, vector<8x128xf32>,
    return
  }
  func.func @transform_0(%arg0: i32) -> (i32, i32) {
    %c0_i32 = arith.constant 0 : i32
    %c0_i32_0 = arith.constant 0 : i32
    return %arg0, %c0_i32 : i32, i32
  }
  func.func @transform_1(%arg0: i32) -> (i32, i32) {
    %c0_i32 = arith.constant 0 : i32
    %c0_i32_0 = arith.constant 0 : i32
    %c0_i32_1 = arith.constant 0 : i32
    return %c0_i32, %c0_i32_0 : i32, i32
  }
  func.func @transform_2(%arg0: i32) -> (i32, i32) {
    %c0_i32 = arith.constant 0 : i32
    %c0_i32_0 = arith.constant 0 : i32
    %c0_i32_1 = arith.constant 0 : i32
    return %c0_i32, %c0_i32_0 : i32, i32
  }
  func.func @transform_3(%arg0: i32) -> (i32, i32) {
    %c0_i32 = arith.constant 0 : i32
    %c0_i32_0 = arith.constant 0 : i32
    %c0_i32_1 = arith.constant 0 : i32
    return %c0_i32, %c0_i32_0 : i32, i32
  }
  func.func @transform_4(%arg0: i32) -> (i32, i32) {
    %c0_i32 = arith.constant 0 : i32
    %c0_i32_0 = arith.constant 0 : i32
    %c0_i32_1 = arith.constant 0 : i32
    return %c0_i32, %c0_i32_0 : i32, i32
  }
  func.func @transform_5(%arg0: i32) -> (i32, i32) {
    %c0_i32 = arith.constant 0 : i32
    %c0_i32_0 = arith.constant 0 : i32
    %c0_i32_1 = arith.constant 0 : i32
    return %c0_i32, %c0_i32_0 : i32, i32
  }
  func.func @transform_6(%arg0: i32) -> (i32, i32) {
    %c0_i32 = arith.constant 0 : i32
    %c0_i32_0 = arith.constant 0 : i32
    %c0_i32_1 = arith.constant 0 : i32
    return %c0_i32, %c0_i32_0 : i32, i32
  }
  func.func @transform_7(%arg0: i32) -> (i32, i32) {
    %c0_i32 = arith.constant 0 : i32
    %c0_i32_0 = arith.constant 0 : i32
    return %arg0, %c0_i32 : i32, i32
  }
}

</mosaic_0001>

<llo_original>
// kernel: tpu_custom_call.1
$region0: #{tpu_custom_call.1}
  #allocation0 [shape = 'u32[]', space=smem, size = 0x4, offset = 0x4, fixed_abs, tag = 'smem constant byte address 0x4 - core index']
  #allocation1 [shape = 'u32[144,128]{1,0:T(1,128)}', space=vmem, size = 0x12000, scoped, tag = 'internal scratch']
  %s0 = inlined_call_operand.hbm [shape: f32[8,16], index: 0, kind: input, shape index: {}]
  %s1 = inlined_call_operand.hbm [shape: bf16[16,128], index: 1, kind: input, shape index: {}]
  %s2 = inlined_call_operand.vmem [shape: f32[1,128], index: 2, kind: input, shape index: {}]
  %s3 = inlined_call_operand.hbm [shape: bf16[128,128], index: 3, kind: input, shape index: {}]
  %s4 = inlined_call_operand.vmem [shape: f32[1,128], index: 4, kind: input, shape index: {}]
  %s5 = inlined_call_operand.hbm [shape: bf16[128,128], index: 5, kind: input, shape index: {}]
  %s6 = inlined_call_operand.vmem [shape: f32[1,128], index: 6, kind: input, shape index: {}]
  %s7 = inlined_call_operand.hbm [shape: f32[8,128], index: 7, kind: output, shape index: {}]
  %s8 = sld [smem:[#allocation0]]
  $region54: #{tpu_custom_call.1} parent=0
    _
  %s10 = ssub.s32 1, %s8
  %s11 = scalar_select 0, %s10, %s8
  $region1: #{tpu_custom_call.1} parent=0
    #allocation2 [shape = 'u8[4096]{0}', space=vmem, size = 0x1000, scoped, tag = 'input window, operand 0, single buffered']
    #allocation3 [shape = 's32[1]{0}', space=sflag, size = 0x4, scoped, tag = 'scoped memory for tpu_custom_call.1']
    #allocation4 [shape = 's32[1]{0}', space=sflag, size = 0x4, scoped, tag = 'scoped memory for tpu_custom_call.1']
    #allocation5 [shape = 'u8[4096]{0}', space=vmem, size = 0x1000, scoped, tag = 'input window, operand 1, single buffered']
    #allocation6 [shape = 's32[1]{0}', space=sflag, size = 0x4, scoped, tag = 'scoped memory for tpu_custom_call.1']
    #allocation7 [shape = 'u8[32768]{0}', space=vmem, size = 0x8000, scoped, tag = 'input window, operand 3, single buffered']
    #allocation8 [shape = 'u8[32768]{0}', space=vmem, size = 0x8000, scoped, tag = 'input window, operand 5, single buffered']
    #allocation9 [shape = 's32[1]{0}', space=sflag, size = 0x4, scoped, tag = 'scoped memory for tpu_custom_call.1']
    #allocation10 [shape = 'u8[4096]{0}', space=vmem, size = 0x1000, scoped, tag = 'output window, operand 0, single buffered']
    %12 = vsyncpa [#allocation3], 0
    %13 = vsyncpa [#allocation6], 0
    %14 = vsyncpa [#allocation9], 0
    %15 = vsyncpa [#allocation4], 0
    // Predicated region
    $region2: #{tpu_custom_call.1} parent=1 // pred_check
      _
    $region3: #{tpu_custom_call.1} parent=1 // pred_check_branch
      %17 = sbr.rel (0) target = $region5
    $region4: #{tpu_custom_call.1} parent=1 // pred_region
      %s19 = ssub.s32 128, 128
      %20 = vsyncadd [#allocation3], %s19
      %s22 = sshll.u32 [#allocation2], 4
      %s23 = int_to_ptr.vmem [resolvable:$true] %s22
      %25 = dma.hbm_to_vmem [thread:$0]  %s0, 128, %s23, [#allocation3]
    $region5: #{tpu_custom_call.1} parent=1 // pred_fallthru
      _
    // Predicated region
    $region6: #{tpu_custom_call.1} parent=1 // pred_check
      _
    $region7: #{tpu_custom_call.1} parent=1 // pred_check_branch
      %27 = sbr.rel (0) target = $region9
    $region8: #{tpu_custom_call.1} parent=1 // pred_region
      %s29 = ssub.s32 128, 128
      %30 = vsyncadd [#allocation6], %s29
      %s31 = sshll.u32 [#allocation5], 4
      %s32 = int_to_ptr.vmem [resolvable:$true] %s31
      %37 = dma.hbm_to_vmem [thread:$0]  %s1, 128, %s32, [#allocation6], 64, 64, 4
    $region9: #{tpu_custom_call.1} parent=1 // pred_fallthru
      _
    // Predicated region
    $region10: #{tpu_custom_call.1} parent=1 // pred_check
      _
    $region11: #{tpu_custom_call.1} parent=1 // pred_check_branch
      %39 = sbr.rel (0) target = $region13
    $region12: #{tpu_custom_call.1} parent=1 // pred_region
      _
    $region13: #{tpu_custom_call.1} parent=1 // pred_fallthru
      _
    // Predicated region
    $region14: #{tpu_custom_call.1} parent=1 // pred_check
      _
    $region15: #{tpu_custom_call.1} parent=1 // pred_check_branch
      %41 = sbr.rel (0) target = $region17
    $region16: #{tpu_custom_call.1} parent=1 // pred_region
      %s43 = ssub.s32 1024, 1024
      %44 = vsyncadd [#allocation6], %s43
      %s45 = sshll.u32 [#allocation7], 4
      %s46 = int_to_ptr.vmem [resolvable:$true] %s45
      %51 = dma.hbm_to_vmem [thread:$0]  %s3, 1024, %s46, [#allocation6], 64, 64, 4
    $region17: #{tpu_custom_call.1} parent=1 // pred_fallthru
      _
    // Predicated region
    $region18: #{tpu_custom_call.1} parent=1 // pred_check
      _
    $region19: #{tpu_custom_call.1} parent=1 // pred_check_branch
      %53 = sbr.rel (0) target = $region21
    $region20: #{tpu_custom_call.1} parent=1 // pred_region
      _
    $region21: #{tpu_custom_call.1} parent=1 // pred_fallthru
      _
    // Predicated region
    $region22: #{tpu_custom_call.1} parent=1 // pred_check
      _
    $region23: #{tpu_custom_call.1} parent=1 // pred_check_branch
      %55 = sbr.rel (0) target = $region25
    $region24: #{tpu_custom_call.1} parent=1 // pred_region
      %s57 = ssub.s32 1024, 1024
      %58 = vsyncadd [#allocation9], %s57
      %s59 = sshll.u32 [#allocation8], 4
      %s60 = int_to_ptr.vmem [resolvable:$true] %s59
      %65 = dma.hbm_to_vmem [thread:$0]  %s5, 1024, %s60, [#allocation9], 64, 64, 4
    $region25: #{tpu_custom_call.1} parent=1 // pred_fallthru
      _
    // Predicated region
    $region26: #{tpu_custom_call.1} parent=1 // pred_check
      _
    $region27: #{tpu_custom_call.1} parent=1 // pred_check_branch
      %67 = sbr.rel (0) target = $region29
    $region28: #{tpu_custom_call.1} parent=1 // pred_region
      _
    $region29: #{tpu_custom_call.1} parent=1 // pred_fallthru
      _
    // Predicated region
    $region30: #{tpu_custom_call.1} parent=1 // pred_check
      _
    $region31: #{tpu_custom_call.1} parent=1 // pred_check_branch
      %69 = sbr.rel (0) target = $region33
    $region32: #{tpu_custom_call.1} parent=1 // pred_region
      %70 = dma.done [#allocation3], 128
    $region33: #{tpu_custom_call.1} parent=1 // pred_fallthru
      _
    // Predicated region
    $region34: #{tpu_custom_call.1} parent=1 // pred_check
      _
    $region35: #{tpu_custom_call.1} parent=1 // pred_check_branch
      %72 = sbr.rel (0) target = $region37
    $region36: #{tpu_custom_call.1} parent=1 // pred_region
      %73 = dma.done [#allocation6], 128
    $region37: #{tpu_custom_call.1} parent=1 // pred_fallthru
      _
    // Predicated region
    $region38: #{tpu_custom_call.1} parent=1 // pred_check
      _
    $region39: #{tpu_custom_call.1} parent=1 // pred_check_branch
      %75 = sbr.rel (0) target = $region41
    $region40: #{tpu_custom_call.1} parent=1 // pred_region
      %76 = dma.done [#allocation6], 1024
    $region41: #{tpu_custom_call.1} parent=1 // pred_fallthru
      _
    // Predicated region
    $region42: #{tpu_custom_call.1} parent=1 // pred_check
      _
    $region43: #{tpu_custom_call.1} parent=1 // pred_check_branch
      %78 = sbr.rel (0) target = $region45
    $region44: #{tpu_custom_call.1} parent=1 // pred_region
      %79 = dma.done [#allocation9], 1024
    $region45: #{tpu_custom_call.1} parent=1 // pred_fallthru
      _
    %v81 = vld [vmem:[#allocation2] sm:$0xff]
    %v82 = vld [vmem:[#allocation5] sm:$0xf]
    %v83 = vld [vmem:[#allocation5 + $0x4] sm:$0xf]
    %v84 = vld [vmem:[%s2] sm:$0x1]
    %v85 = vpack.c.bf16 %v81, %v81
    %v87 = vlaneseq
    %v88 = vshrl.u32 %v87, 7
    %v89 = vsub.s32 0, %v88
    %v90 = vrot.slane %v84, %v89
    %v94 = vunpack.c.l.b16 %v82
    %v95 = vunpack.c.l.b16 %v83
    %v96 = vpack.c.b16 %v95, %v94
    %vm98 = vcmask 130048
    %v100 = vsel %vm98, %v85, 0
    %102 = vmatprep.subr.bf16.mxu0 0
    %103 = vmatpush1.bf16.msra.mxu0 0
    %104 = vmatprep.subr.bf16.mxu0 0
    %105 = vmatpush1.bf16.msra.mxu0 0
    %106 = vmatprep.subr.bf16.mxu0 0
    %107 = vmatpush1.bf16.msra.mxu0 0
    %108 = vmatprep.subr.bf16.mxu0 0
    %109 = vmatpush1.bf16.msra.mxu0 0
    %110 = vmatprep.subr.bf16.mxu0 0
    %111 = vmatpush1.bf16.msra.mxu0 0
    %112 = vmatprep.subr.bf16.mxu0 0
    %113 = vmatpush1.bf16.msra.mxu0 0
    %114 = vmatprep.subr.bf16.mxu0 0
    %115 = vmatpush1.bf16.msra.mxu0 0
    %116 = vmatprep.subr.bf16.mxu0 0
    %117 = vmatpush1.bf16.msra.mxu0 %v96
    %118 = vmatprep.subr.bf16.mxu0 0
    %119 = vmatpush2.bf16.msra.mxu0 0
    %120 = vmatprep.subr.bf16.mxu0 0
    %121 = vmatpush2.bf16.msra.mxu0 0
    %122 = vmatprep.subr.bf16.mxu0 0
    %123 = vmatpush2.bf16.msra.mxu0 0
    %124 = vmatprep.subr.bf16.mxu0 0
    %125 = vmatpush2.bf16.msra.mxu0 0
    %126 = vmatprep.subr.bf16.mxu0 0
    %127 = vmatpush2.bf16.msra.mxu0 0
    %128 = vmatprep.subr.bf16.mxu0 0
    %129 = vmatpush2.bf16.msra.mxu0 0
    %130 = vmatprep.subr.bf16.mxu0 0
    %131 = vmatpush2.bf16.msra.mxu0 0
    %132 = vmatprep.subr.bf16.mxu0 0
    %133 = vmatpush2.bf16.msra.mxu0 0
    %134 = vmatprep.mubr.bf16.mxu0 0
    %135 = vmatmul.mubr.bf16.gmra.mxu0 %v100
    %v136 = vpop.f32.mrf.mxu0
    %v137 = vadd.f32 %v90, %v136
    %v138 = vpop.f32.mrf.mxu0
    %v139 = vpop.f32.mrf.mxu0
    %v140 = vpop.f32.mrf.mxu0
    %141 = vdwg.mxu0
    %v142 = vmax.f32 %v137, 0.0
    %v143 = vld [vmem:[#allocation7] sm:$0xf]
    %v144 = vld [vmem:[#allocation7 + $0x4] sm:$0xf]
    %v145 = vld [vmem:[#allocation7 + $0x8] sm:$0xf]
    %v146 = vld [vmem:[#allocation7 + $0xc] sm:$0xf]
    %v147 = vld [vmem:[#allocation7 + $0x10] sm:$0xf]
    %v148 = vld [vmem:[#allocation7 + $0x14] sm:$0xf]
    %v149 = vld [vmem:[#allocation7 + $0x18] sm:$0xf]
    %v150 = vld [vmem:[#allocation7 + $0x1c] sm:$0xf]
    %v151 = vld [vmem:[#allocation7 + $0x20] sm:$0xf]
    %v152 = vld [vmem:[#allocation7 + $0x24] sm:$0xf]
    %v153 = vld [vmem:[#allocation7 + $0x28] sm:$0xf]
    %v154 = vld [vmem:[#allocation7 + $0x2c] sm:$0xf]
    %v155 = vld [vmem:[#allocation7 + $0x30] sm:$0xf]
    %v156 = vld [vmem:[#allocation7 + $0x34] sm:$0xf]
    %v157 = vld [vmem:[#allocation7 + $0x38] sm:$0xf]
    %v158 = vld [vmem:[#allocation7 + $0x3c] sm:$0xf]
    %v159 = vld [vmem:[%s4] sm:$0x1]
    %v160 = vpack.c.bf16 %v142, %v142
    %v162 = vlaneseq
    %v163 = vshrl.u32 %v162, 7
    %v164 = vsub.s32 0, %v163
    %v165 = vrot.slane %v159, %v164
    %v183 = vunpack.c.l.b16 %v143
    %v184 = vunpack.c.l.b16 %v144
    %v185 = vunpack.c.l.b16 %v145
    %v186 = vunpack.c.l.b16 %v146
    %v187 = vunpack.c.l.b16 %v147
    %v188 = vunpack.c.l.b16 %v148
    %v189 = vunpack.c.l.b16 %v149
    %v190 = vunpack.c.l.b16 %v150
    %v191 = vunpack.c.l.b16 %v151
    %v192 = vunpack.c.l.b16 %v152
    %v193 = vunpack.c.l.b16 %v153
    %v194 = vunpack.c.l.b16 %v154
    %v195 = vunpack.c.l.b16 %v155
    %v196 = vunpack.c.l.b16 %v156
    %v197 = vunpack.c.l.b16 %v157
    %v198 = vunpack.c.l.b16 %v158
    %v199 = vpack.c.b16 %v184, %v183
    %v200 = vpack.c.b16 %v186, %v185
    %v201 = vpack.c.b16 %v188, %v187
    %v202 = vpack.c.b16 %v190, %v189
    %v203 = vpack.c.b16 %v192, %v191
    %v204 = vpack.c.b16 %v194, %v193
    %v205 = vpack.c.b16 %v196, %v195
    %v206 = vpack.c.b16 %v198, %v197
    %215 = vmatprep.subr.bf16.mxu0 0
    %216 = vmatpush1.bf16.msra.mxu0 %v206
    %217 = vmatprep.subr.bf16.mxu0 0
    %218 = vmatpush1.bf16.msra.mxu0 %v205
    %219 = vmatprep.subr.bf16.mxu0 0
    %220 = vmatpush1.bf16.msra.mxu0 %v204
    %221 = vmatprep.subr.bf16.mxu0 0
    %222 = vmatpush1.bf16.msra.mxu0 %v203
    %223 = vmatprep.subr.bf16.mxu0 0
    %224 = vmatpush1.bf16.msra.mxu0 %v202
    %225 = vmatprep.subr.bf16.mxu0 0
    %226 = vmatpush1.bf16.msra.mxu0 %v201
    %227 = vmatprep.subr.bf16.mxu0 0
    %228 = vmatpush1.bf16.msra.mxu0 %v200
    %229 = vmatprep.subr.bf16.mxu0 0
    %230 = vmatpush1.bf16.msra.mxu0 %v199
    %231 = vmatprep.subr.bf16.mxu0 0
    %232 = vmatpush2.bf16.msra.mxu0 0
    %233 = vmatprep.subr.bf16.mxu0 0
    %234 = vmatpush2.bf16.msra.mxu0 0
    %235 = vmatprep.subr.bf16.mxu0 0
    %236 = vmatpush2.bf16.msra.mxu0 0
    %237 = vmatprep.subr.bf16.mxu0 0
    %238 = vmatpush2.bf16.msra.mxu0 0
    %239 = vmatprep.subr.bf16.mxu0 0
    %240 = vmatpush2.bf16.msra.mxu0 0
    %241 = vmatprep.subr.bf16.mxu0 0
    %242 = vmatpush2.bf16.msra.mxu0 0
    %243 = vmatprep.subr.bf16.mxu0 0
    %244 = vmatpush2.bf16.msra.mxu0 0
    %245 = vmatprep.subr.bf16.mxu0 0
    %246 = vmatpush2.bf16.msra.mxu0 0
    %247 = vmatprep.mubr.bf16.mxu0 0
    %248 = vmatmul.mubr.bf16.gmra.mxu0 %v160
    %v249 = vpop.f32.mrf.mxu0
    %v250 = vadd.f32 %v165, %v249
    %v251 = vpop.f32.mrf.mxu0
    %v252 = vpop.f32.mrf.mxu0
    %v253 = vpop.f32.mrf.mxu0
    %254 = vdwg.mxu0
    %v255 = vmax.f32 %v250, 0.0
    %v256 = vld [vmem:[#allocation8] sm:$0xf]
    %v257 = vld [vmem:[#allocation8 + $0x4] sm:$0xf]
    %v258 = vld [vmem:[#allocation8 + $0x8] sm:$0xf]
    %v259 = vld [vmem:[#allocation8 + $0xc] sm:$0xf]
    %v260 = vld [vmem:[#allocation8 + $0x10] sm:$0xf]
    %v261 = vld [vmem:[#allocation8 + $0x14] sm:$0xf]
    %v262 = vld [vmem:[#allocation8 + $0x18] sm:$0xf]
    %v263 = vld [vmem:[#allocation8 + $0x1c] sm:$0xf]
    %v264 = vld [vmem:[#allocation8 + $0x20] sm:$0xf]
    %v265 = vld [vmem:[#allocation8 + $0x24] sm:$0xf]
    %v266 = vld [vmem:[#allocation8 + $0x28] sm:$0xf]
    %v267 = vld [vmem:[#allocation8 + $0x2c] sm:$0xf]
    %v268 = vld [vmem:[#allocation8 + $0x30] sm:$0xf]
    %v269 = vld [vmem:[#allocation8 + $0x34] sm:$0xf]
    %v270 = vld [vmem:[#allocation8 + $0x38] sm:$0xf]
    %v271 = vld [vmem:[#allocation8 + $0x3c] sm:$0xf]
    %v272 = vld [vmem:[%s6] sm:$0x1]
    %v273 = vpack.c.bf16 %v255, %v255
    %v275 = vlaneseq
    %v276 = vshrl.u32 %v275, 7
    %v277 = vsub.s32 0, %v276
    %v278 = vrot.slane %v272, %v277
    %v296 = vunpack.c.l.b16 %v256
    %v297 = vunpack.c.l.b16 %v257
    %v298 = vunpack.c.l.b16 %v258
    %v299 = vunpack.c.l.b16 %v259
    %v300 = vunpack.c.l.b16 %v260
    %v301 = vunpack.c.l.b16 %v261
    %v302 = vunpack.c.l.b16 %v262
    %v303 = vunpack.c.l.b16 %v263
    %v304 = vunpack.c.l.b16 %v264
    %v305 = vunpack.c.l.b16 %v265
    %v306 = vunpack.c.l.b16 %v266
    %v307 = vunpack.c.l.b16 %v267
    %v308 = vunpack.c.l.b16 %v268
    %v309 = vunpack.c.l.b16 %v269
    %v310 = vunpack.c.l.b16 %v270
    %v311 = vunpack.c.l.b16 %v271
    %v312 = vpack.c.b16 %v297, %v296
    %v313 = vpack.c.b16 %v299, %v298
    %v314 = vpack.c.b16 %v301, %v300
    %v315 = vpack.c.b16 %v303, %v302
    %v316 = vpack.c.b16 %v305, %v304
    %v317 = vpack.c.b16 %v307, %v306
    %v318 = vpack.c.b16 %v309, %v308
    %v319 = vpack.c.b16 %v311, %v310
    %328 = vmatprep.subr.bf16.mxu0 0
    %329 = vmatpush1.bf16.msra.mxu0 %v319
    %330 = vmatprep.subr.bf16.mxu0 0
    %331 = vmatpush1.bf16.msra.mxu0 %v318
    %332 = vmatprep.subr.bf16.mxu0 0
    %333 = vmatpush1.bf16.msra.mxu0 %v317
    %334 = vmatprep.subr.bf16.mxu0 0
    %335 = vmatpush1.bf16.msra.mxu0 %v316
    %336 = vmatprep.subr.bf16.mxu0 0
    %337 = vmatpush1.bf16.msra.mxu0 %v315
    %338 = vmatprep.subr.bf16.mxu0 0
    %339 = vmatpush1.bf16.msra.mxu0 %v314
    %340 = vmatprep.subr.bf16.mxu0 0
    %341 = vmatpush1.bf16.msra.mxu0 %v313
    %342 = vmatprep.subr.bf16.mxu0 0
    %343 = vmatpush1.bf16.msra.mxu0 %v312
    %344 = vmatprep.subr.bf16.mxu0 0
    %345 = vmatpush2.bf16.msra.mxu0 0
    %346 = vmatprep.subr.bf16.mxu0 0
    %347 = vmatpush2.bf16.msra.mxu0 0
    %348 = vmatprep.subr.bf16.mxu0 0
    %349 = vmatpush2.bf16.msra.mxu0 0
    %350 = vmatprep.subr.bf16.mxu0 0
    %351 = vmatpush2.bf16.msra.mxu0 0
    %352 = vmatprep.subr.bf16.mxu0 0
    %353 = vmatpush2.bf16.msra.mxu0 0
    %354 = vmatprep.subr.bf16.mxu0 0
    %355 = vmatpush2.bf16.msra.mxu0 0
    %356 = vmatprep.subr.bf16.mxu0 0
    %357 = vmatpush2.bf16.msra.mxu0 0
    %358 = vmatprep.subr.bf16.mxu0 0
    %359 = vmatpush2.bf16.msra.mxu0 0
    %360 = vmatprep.mubr.bf16.mxu0 0
    %361 = vmatmul.mubr.bf16.gmra.mxu0 %v273
    %v362 = vpop.f32.mrf.mxu0
    %v363 = vadd.f32 %v278, %v362
    %v364 = vpop.f32.mrf.mxu0
    %v365 = vpop.f32.mrf.mxu0
    %v366 = vpop.f32.mrf.mxu0
    %367 = vdwg.mxu0
    %368 = vst [vmem:[#allocation10] sm:$0xff] %v363
    // Predicated region
    $region46: #{tpu_custom_call.1} parent=1 // pred_check
      _
    $region47: #{tpu_custom_call.1} parent=1 // pred_check_branch
      %370 = sbr.rel (0) target = $region49
    $region48: #{tpu_custom_call.1} parent=1 // pred_region
      %s372 = ssub.s32 128, 128
      %373 = vsyncadd [#allocation4], %s372
      %s375 = sshll.u32 [#allocation10], 4
      %s376 = int_to_ptr.vmem [resolvable:$true] %s375
      %378 = dma.vmem_to_hbm [thread:$0]  %s376, 128, %s7, [#allocation4]
    $region49: #{tpu_custom_call.1} parent=1 // pred_fallthru
      _
    // Predicated region
    $region50: #{tpu_custom_call.1} parent=1 // pred_check
      _
    $region51: #{tpu_custom_call.1} parent=1 // pred_check_branch
      %380 = sbr.rel (0) target = $region53
    $region52: #{tpu_custom_call.1} parent=1 // pred_region
      %381 = dma.done [#allocation4], 128
    $region53: #{tpu_custom_call.1} parent=1 // pred_fallthru
      _
    %382 = vsyncpa [#allocation3], 1
    %383 = vsyncpa [#allocation6], 1
    %384 = vsyncpa [#allocation9], 1
    %385 = vsyncpa [#allocation4], 1

</llo_original>
